<compile_context>
chip_gen: v5e
topology: v5e:2x2
jax: 0.10.0
libtpu: 0.0.40
codegen_flags: <defaults>
</compile_context>

<pallas_src>
import functools
import math

import jax
import jax.numpy as jnp
from jax.experimental import pallas as pl
from jax.experimental.pallas import tpu as pltpu

# Safe on v5e/v6e (128 MiB physical) and equals the v7x scoped default (64 MiB/TC).
_VMEM_LIMIT = 32 * 1024 * 1024


# ----------------------------------------------------------------------------
# tiling helpers
# ----------------------------------------------------------------------------
def _round_up(x, m):
    return ((x + m - 1) // m) * m


def _choose_tile(dim, target, align):
    """Return (tile, padded_dim) for a GEMM dimension.

    The tile is either the full dim (small dims: always a legal block) or a
    multiple of `align`; if no aligned divisor of `dim` exists, `dim` is padded
    up to a multiple of the aligned target (the wrapper zero-pads / slices)."""
    if dim <= target:
        return dim, dim
    tgt = max(align, (target // align) * align)
    t = tgt
    while t >= align:
        if dim % t == 0:
            return t, dim
        t -= align
    return tgt, _round_up(dim, tgt)


def _pick_seq_tile(s, target):
    """Largest multiple-of-8 divisor of s that is <= target; else the full dim
    (always a legal block — never an unaligned partial tile)."""
    if s <= target:
        return s
    t = (target // 8) * 8
    while t >= 8:
        if s % t == 0:
            return t
        t -= 8
    return s


def _pick_head_chunk(nh, target=8):
    """Head-chunk size: the full head count if small, otherwise a multiple-of-8
    divisor of nh (keeps the chunked NH block dim legal for BlockSpec)."""
    if nh <= target or nh % 8 != 0:
        return nh
    ch = 8
    while ch * 2 <= target and nh % (ch * 2) == 0:
        ch *= 2
    return ch


# ----------------------------------------------------------------------------
# Tiled linear kernel:  y = x @ w + b   (w already pre-transposed to [in, out])
# ----------------------------------------------------------------------------
def _linear_kernel(x_ref, w_ref, b_ref, o_ref, acc_ref):
    # x:[tm,tk]  w:[tk,tn]  b:[1,tn]  o:[tm,tn]  acc:[tm,tn] f32
    @pl.when(pl.program_id(2) == 0)
    def _():
        acc_ref[...] = jnp.zeros(acc_ref.shape, jnp.float32)

    # bf16 MXU feed, f32 accumulation (matches default-precision accuracy).
    acc_ref[...] += jnp.dot(
        x_ref[...].astype(jnp.bfloat16),
        w_ref[...].astype(jnp.bfloat16),
        preferred_element_type=jnp.float32)

    # Bias added exactly once, on the last reduction step.
    @pl.when(pl.program_id(2) == pl.num_programs(2) - 1)
    def _():
        o_ref[...] = (acc_ref[...] + b_ref[...].astype(jnp.float32)).astype(o_ref.dtype)


def pallas_linear(x, w, b, *, tm=512, tn=1024, tk=512):
    """x:[R,K]  w:[K,N] (pre-transposed torch weight)  b:[N]  ->  y:[R,N]."""
    R, K = x.shape
    N = w.shape[1]
    tm, Rp = _choose_tile(R, tm, 8)      # sublane dim of x / out
    tn, Np = _choose_tile(N, tn, 128)    # lane dim of w / out
    tk, Kp = _choose_tile(K, tk, 128)    # lane dim of x, sublane dim of w
    if (Rp, Kp) != (R, K):
        x = jnp.pad(x, ((0, Rp - R), (0, Kp - K)))
    if (Kp, Np) != (K, N):
        w = jnp.pad(w, ((0, Kp - K), (0, Np - N)))
    if Np != N:
        b = jnp.pad(b, (0, Np - N))

    grid = (Rp // tm, Np // tn, Kp // tk)
    y = pl.pallas_call(
        _linear_kernel,
        out_shape=jax.ShapeDtypeStruct((Rp, Np), x.dtype),
        grid=grid,
        in_specs=[
            pl.BlockSpec((tm, tk), lambda i, j, k: (i, k)),
            pl.BlockSpec((tk, tn), lambda i, j, k: (k, j)),
            pl.BlockSpec((1, tn), lambda i, j, k: (0, j)),
        ],
        out_specs=pl.BlockSpec((tm, tn), lambda i, j, k: (i, j)),
        scratch_shapes=[pltpu.VMEM((tm, tn), jnp.float32)],
        compiler_params=pltpu.CompilerParams(
            dimension_semantics=("parallel", "parallel", "arbitrary"),
            vmem_limit_bytes=_VMEM_LIMIT),
    )(x, w, b.reshape(1, Np))
    if (Rp, Np) != (R, N):
        y = y[:R, :N]
    return y


# ----------------------------------------------------------------------------
# Flash-style multi-modal attention kernel (head-chunked, lane-dense output)
# ----------------------------------------------------------------------------
def _flash_attn_kernel(tbl_ref, q_ref, k_ref, v_ref, o_ref,
                       m_scr, l_scr, acc_scr, *, scale, chunk):
    # q:[tq,CH,D]  k,v:[tkv,CH,D]  o:[tq,H]
    # scratch (persist across hc & kv axes): m,l:[NH,tq,1]  acc:[NH,tq,D]  (f32)
    hc = pl.program_id(3)
    kv = pl.program_id(4)
    hs = pl.ds(hc * chunk, chunk)          # this chunk's head slice in scratch

    @pl.when(kv == 0)
    def _():
        m_scr[hs] = jnp.full((chunk,) + m_scr.shape[1:], -jnp.inf, jnp.float32)
        l_scr[hs] = jnp.zeros((chunk,) + l_scr.shape[1:], jnp.float32)
        acc_scr[hs] = jnp.zeros((chunk,) + acc_scr.shape[1:], jnp.float32)

    # bf16 MXU feed; scale folded into Q.  Softmax math stays f32.
    q = (q_ref[...] * scale).astype(jnp.bfloat16)    # [tq, CH, D]
    k = k_ref[...].astype(jnp.bfloat16)              # [tkv, CH, D]
    v = v_ref[...].astype(jnp.bfloat16)              # [tkv, CH, D]

    # Scores: batch over heads, contract head_dim.  [CH, tq, tkv] in f32.
    s = jnp.einsum("qhd,khd->hqk", q, k, preferred_element_type=jnp.float32)

    m_prev = m_scr[hs]                                               # [CH,tq,1]
    m_new = jnp.maximum(m_prev, jnp.max(s, axis=-1, keepdims=True))
    alpha = jnp.exp(m_prev - m_new)
    p = jnp.exp(s - m_new)                                           # [CH,tq,tkv]
    l_scr[hs] = alpha * l_scr[hs] + jnp.sum(p, axis=-1, keepdims=True)
    pv = jnp.einsum("hqk,khd->hqd", p.astype(jnp.bfloat16), v,
                    preferred_element_type=jnp.float32)              # [CH,tq,D]
    acc_scr[hs] = alpha * acc_scr[hs] + pv
    m_scr[hs] = m_new

    # Finalize once, after the last kv step of the last head chunk; write the
    # output as a lane-dense [tq, NH*D] slab (unmasked stores).
    @pl.when((kv == pl.num_programs(4) - 1) & (hc == pl.num_programs(3) - 1))
    def _():
        inv_l = pl.reciprocal(l_scr[...], approx=False)   # exact; only [NH,tq,1]
        ctx = acc_scr[...] * inv_l                        # [NH, tq, D]
        o_ref[...] = jnp.transpose(ctx, (1, 0, 2)).reshape(o_ref.shape).astype(o_ref.dtype)


def pallas_mm_attention(qkv, other_tbl, *, head_dim, tq=256, tkv=256, head_chunk=8):
    """qkv: [M, B, S, 3, NH, D] fused projection output (q=0, k=1, v=2 slices
    are read in place via the BlockSpec index_maps).
    other_tbl: int32 [M*(M-1)]; row i lists the modal indices != i.
    Returns ctx: [M, B, S, NH*D]  (head-major per token, lane-dense)."""
    M, B, S, _, NH, D = qkv.shape
    H = NH * D
    tq = _pick_seq_tile(S, tq)
    tkv = _pick_seq_tile(S, tkv)
    n_q, n_kv = S // tq, S // tkv
    n_kv_total = (M - 1) * n_kv
    CH = _pick_head_chunk(NH, head_chunk)
    n_hc = NH // CH
    scale = 1.0 / math.sqrt(head_dim)

    def q_map(i, b, qi, hc, kvi, tbl):
        return (i, b, qi, 0, hc, 0)

    def _kv_map(qkv_idx):
        def kv_map(i, b, qi, hc, kvi, tbl):
            other = tbl[i * (M - 1) + kvi // n_kv]      # which "other" modal
            return (other, b, kvi % n_kv, qkv_idx, hc, 0)
        return kv_map

    def o_map(i, b, qi, hc, kvi, tbl):
        return (i, b, qi, 0)

    kern = functools.partial(_flash_attn_kernel, scale=scale, chunk=CH)
    return pl.pallas_call(
        kern,
        out_shape=jax.ShapeDtypeStruct((M, B, S, H), qkv.dtype),
        grid_spec=pltpu.PrefetchScalarGridSpec(
            num_scalar_prefetch=1,
            grid=(M, B, n_q, n_hc, n_kv_total),
            in_specs=[
                pl.BlockSpec((None, None, tq, None, CH, D), q_map),
                pl.BlockSpec((None, None, tkv, None, CH, D), _kv_map(1)),
                pl.BlockSpec((None, None, tkv, None, CH, D), _kv_map(2)),
            ],
            out_specs=pl.BlockSpec((None, None, tq, H), o_map),
            scratch_shapes=[
                pltpu.VMEM((NH, tq, 1), jnp.float32),   # running max
                pltpu.VMEM((NH, tq, 1), jnp.float32),   # running denom
                pltpu.VMEM((NH, tq, D), jnp.float32),   # running context
            ],
        ),
        compiler_params=pltpu.CompilerParams(
            dimension_semantics=("parallel", "parallel", "parallel",
                                 "arbitrary", "arbitrary"),
            vmem_limit_bytes=_VMEM_LIMIT),
    )(other_tbl, qkv, qkv, qkv)


# ----------------------------------------------------------------------------
# MMAttention forward (Pallas-backed)
# ----------------------------------------------------------------------------
def mm_attention_forward(hidden_states_list, params, num_heads):
    M = len(hidden_states_list)
    assert M >= 2, "MMAttention needs at least two modalities"
    B, S, H = hidden_states_list[0].shape
    NH = num_heads
    D = H // NH

    # Fused QKV weights; transposed ONCE in HBM to [in, out] so the GEMM
    # contracts ((1,),(0,)) — no per-tile weight transpose in the kernel.
    wqkv_t = jnp.concatenate(
        [params["wq"], params["wk"], params["wv"]], axis=0).T          # [H, 3H]
    bqkv = jnp.concatenate(
        [params["bq"], params["bk"], params["bv"]], axis=0)            # [3H]

    x_all = jnp.stack(hidden_states_list, axis=0).reshape(M * B * S, H)
    qkv = pallas_linear(x_all, wqkv_t, bqkv).reshape(M, B, S, 3, NH, D)

    # Scalar-prefetched table of "other modal" indices (replaces K/V concat).
    other_tbl = jnp.asarray(
        [j for i in range(M) for j in range(M) if j != i], dtype=jnp.int32)

    ctx = pallas_mm_attention(qkv, other_tbl, head_dim=D)     # [M, B, S, H]

    # ctx is already head-major [.., NH*D] == torch's permute(0,2,1,3).view.
    out = pallas_linear(ctx.reshape(M * B * S, H), params["wo"].T, params["bo"])
    out = out.reshape(M, B, S, H)
    return [out[i] for i in range(M)]


# ----------------------------------------------------------------------------
# Pure-JAX reference for verification
# ----------------------------------------------------------------------------
def mm_attention_ref(hidden_states_list, params, num_heads):
    M = len(hidden_states_list)
    B, S, H = hidden_states_list[0].shape
    D = H // num_heads

    def proj(x, w, b):
        y = x @ w.T + b
        return jnp.transpose(y.reshape(B, S, num_heads, D), (0, 2, 1, 3))

    qs = [proj(x, params["wq"], params["bq"]) for x in hidden_states_list]
    ks = [proj(x, params["wk"], params["bk"]) for x in hidden_states_list]
    vs = [proj(x, params["wv"], params["bv"]) for x in hidden_states_list]

    outs = []
    for i in range(M):
        k = jnp.concatenate([ks[j] for j in range(M) if j != i], axis=2)
        v = jnp.concatenate([vs[j] for j in range(M) if j != i], axis=2)
        s = jnp.einsum("bhqd,bhkd->bhqk", qs[i], k) / math.sqrt(D)
        p = jax.nn.softmax(s, axis=-1)
        ctx = jnp.einsum("bhqk,bhkd->bhqd", p, v)
        ctx = jnp.transpose(ctx, (0, 2, 1, 3)).reshape(B, S, H)
        outs.append(ctx @ params["wo"].T + params["bo"])
    return outs


# ----------------------------------------------------------------------------
# Main
# ----------------------------------------------------------------------------
if __name__ == "__main__":
    # Small, module-consistent shapes.
    B, S, H = 2, 8, 32
    NUM_HEADS = 4
    NUM_MODALS = 3

    key = jax.random.PRNGKey(0)
    keys = jax.random.split(key, 8 + NUM_MODALS)

    def init_linear(kw, kb, out_dim, in_dim):
        bound = 1.0 / math.sqrt(in_dim)
        w = jax.random.uniform(kw, (out_dim, in_dim), jnp.float32, -bound, bound)
        b = jax.random.uniform(kb, (out_dim,), jnp.float32, -bound, bound)
        return w, b

    wq, bq = init_linear(keys[0], keys[1], H, H)
    wk, bk = init_linear(keys[2], keys[3], H, H)
    wv, bv = init_linear(keys[4], keys[5], H, H)
    wo, bo = init_linear(keys[6], keys[7], H, H)
    params = dict(wq=wq, bq=bq, wk=wk, bk=bk, wv=wv, bv=bv, wo=wo, bo=bo)

    hidden_states_list = [
        jax.random.normal(keys[8 + m], (B, S, H), jnp.float32)
        for m in range(NUM_MODALS)
    ]

    outs = mm_attention_forward(hidden_states_list, params, NUM_HEADS)
    outs = [jax.block_until_ready(o) for o in outs]

    refs = mm_attention_ref(hidden_states_list, params, NUM_HEADS)
    for o, r in zip(outs, refs):
        assert o.shape == (B, S, H)
        # Tolerance covers bf16 MXU multiplicands (same as the TPU default-
        # precision reference path) plus online-softmax accumulation order.
        err = float(jnp.max(jnp.abs(o - r)))
        assert jnp.allclose(o, r, atol=3e-3, rtol=3e-3), \
            f"mismatch vs reference (max abs err {err})"

    print("KERNEL_OK")
</pallas_src>

<mosaic_0001>
module attributes {stable_mosaic.version = 11 : i64} {
  func.func @_linear_kernel(%arg0: i32, %arg1: i32, %arg2: i32, %arg3: memref<48x32xf32, #tpu.memory_space<vmem>>, %arg4: memref<32x96xf32, #tpu.memory_space<vmem>>, %arg5: memref<1x96xf32, #tpu.memory_space<vmem>>, %arg6: memref<48x96xf32, #tpu.memory_space<vmem>>, %arg7: memref<48x96xf32, #tpu.memory_space<vmem>>) attributes {dimension_semantics = [#tpu.dimension_semantics<parallel>, #tpu.dimension_semantics<parallel>, #tpu.dimension_semantics<arbitrary>], iteration_bounds = array<i64: 1, 1, 1>, scalar_prefetch = 0 : i64, scratch_operands = 1 : i64, tpu.core_type = #tpu.core_type<tc>, window_params = [{transform_indices = @transform_0, window_bounds = array<i64: 48, 32>}, {transform_indices = @transform_1, window_bounds = array<i64: 32, 96>}, {transform_indices = @transform_2, window_bounds = array<i64: 1, 96>}, {transform_indices = @transform_3, window_bounds = array<i64: 48, 96>}]} {
    %c0_i32 = arith.constant 0 : i32
    %0 = arith.cmpi eq, %arg2, %c0_i32 : i32
    %1 = arith.extui %0 : i1 to i32
    %c0_i32_0 = arith.constant 0 : i32
    %2 = arith.cmpi ne, %1, %c0_i32_0 : i32
    scf.if %2 {
      %cst_10 = arith.constant 0.000000e+00 : f32
      %14 = vector.broadcast %cst_10 : f32 to vector<48x96xf32>
      %c0_11 = arith.constant 0 : index
      %c0_12 = arith.constant 0 : index
      %15 = vector.load %arg7[%c0_11, %c0_12] : memref<48x96xf32, #tpu.memory_space<vmem>>, vector<48x96xf32>
      tpu.vector_store %arg7[%c0_11, %c0_12], %14 {strides = array<i32>} : memref<48x96xf32, #tpu.memory_space<vmem>>, vector<48x96xf32>,
    } else {
    }
    %c0 = arith.constant 0 : index
    %c0_1 = arith.constant 0 : index
    %3 = vector.load %arg7[%c0, %c0_1] : memref<48x96xf32, #tpu.memory_space<vmem>>, vector<48x96xf32>
    %c0_2 = arith.constant 0 : index
    %c0_3 = arith.constant 0 : index
    %4 = vector.load %arg3[%c0_2, %c0_3] : memref<48x32xf32, #tpu.memory_space<vmem>>, vector<48x32xf32>
    %5 = arith.truncf %4 : vector<48x32xf32> to vector<48x32xbf16>
    %c0_4 = arith.constant 0 : index
    %c0_5 = arith.constant 0 : index
    %6 = vector.load %arg4[%c0_4, %c0_5] : memref<32x96xf32, #tpu.memory_space<vmem>>, vector<32x96xf32>
    %7 = arith.truncf %6 : vector<32x96xf32> to vector<32x96xbf16>
    %cst = arith.constant dense<0.000000e+00> : vector<48x96xf32>
    %8 = tpu.matmul %5, %7, %cst {dimension_numbers = #tpu.dot_dimension_numbers<[1], [0], [0], [1], [0, 0, 1, 1], [], []>} : vector<48x32xbf16>, vector<32x96xbf16>, vector<48x96xf32> -> vector<48x96xf32>
    %9 = arith.addf %3, %8 : vector<48x96xf32>
    %c0_6 = arith.constant 0 : index
    %c0_7 = arith.constant 0 : index
    %10 = vector.load %arg7[%c0_6, %c0_7] : memref<48x96xf32, #tpu.memory_space<vmem>>, vector<48x96xf32>
    tpu.vector_store %arg7[%c0_6, %c0_7], %9 {strides = array<i32>} : memref<48x96xf32, #tpu.memory_space<vmem>>, vector<48x96xf32>,
    %c0_i32_8 = arith.constant 0 : i32
    %11 = arith.cmpi eq, %arg2, %c0_i32_8 : i32
    %12 = arith.extui %11 : i1 to i32
    %c0_i32_9 = arith.constant 0 : i32
    %13 = arith.cmpi ne, %12, %c0_i32_9 : i32
    scf.if %13 {
      %c0_10 = arith.constant 0 : index
      %c0_11 = arith.constant 0 : index
      %14 = vector.load %arg7[%c0_10, %c0_11] : memref<48x96xf32, #tpu.memory_space<vmem>>, vector<48x96xf32>
      %c0_12 = arith.constant 0 : index
      %c0_13 = arith.constant 0 : index
      %15 = vector.load %arg5[%c0_12, %c0_13] : memref<1x96xf32, #tpu.memory_space<vmem>>, vector<1x96xf32>
      %16 = vector.broadcast %15 : vector<1x96xf32> to vector<48x96xf32>
      %17 = arith.addf %14, %16 : vector<48x96xf32>
      %c0_14 = arith.constant 0 : index
      %c0_15 = arith.constant 0 : index
      %18 = vector.load %arg6[%c0_14, %c0_15] : memref<48x96xf32, #tpu.memory_space<vmem>>, vector<48x96xf32>
      tpu.vector_store %arg6[%c0_14, %c0_15], %17 {strides = array<i32>} : memref<48x96xf32, #tpu.memory_space<vmem>>, vector<48x96xf32>,
    } else {
    }
    return
  }
  func.func @transform_0(%arg0: i32, %arg1: i32, %arg2: i32) -> (i32, i32) {
    %c0_i32 = arith.constant 0 : i32
    return %arg0, %arg2 : i32, i32
  }
  func.func @transform_1(%arg0: i32, %arg1: i32, %arg2: i32) -> (i32, i32) {
    %c0_i32 = arith.constant 0 : i32
    return %arg2, %arg1 : i32, i32
  }
  func.func @transform_2(%arg0: i32, %arg1: i32, %arg2: i32) -> (i32, i32) {
    %c0_i32 = arith.constant 0 : i32
    %c0_i32_0 = arith.constant 0 : i32
    return %c0_i32, %arg1 : i32, i32
  }
  func.func @transform_3(%arg0: i32, %arg1: i32, %arg2: i32) -> (i32, i32) {
    %c0_i32 = arith.constant 0 : i32
    return %arg0, %arg1 : i32, i32
  }
}

</mosaic_0001>

<llo_original>
// kernel: tpu_custom_call.1
$region0: #{tpu_custom_call.1}
  #allocation0 [shape = 'u32[]', space=smem, size = 0x4, offset = 0x4, fixed_abs, tag = 'smem constant byte address 0x4 - core index']
  #allocation1 [shape = 'u32[72,128]{1,0:T(1,128)}', space=vmem, size = 0x9000, scoped, tag = 'internal scratch']
  #allocation2 [shape = 'f32[48,96]{1,0:T(8,128)}', space=vmem, size = 0x6000, scoped, tag = 'scratch operand']
  %s0 = inlined_call_operand.vmem [shape: f32[48,32], index: 0, kind: input, shape index: {}]
  %s1 = inlined_call_operand.vmem [shape: f32[32,96], index: 1, kind: input, shape index: {}]
  %s2 = inlined_call_operand.vmem [shape: f32[1,96], index: 2, kind: input, shape index: {}]
  %s3 = inlined_call_operand.hbm [shape: f32[48,96], index: 3, kind: output, shape index: {}]
  %s4 = sld [smem:[#allocation0]]
  $region30: #{tpu_custom_call.1} parent=0
    _
  %s6 = ssub.s32 1, %s4
  %s7 = scalar_select 0, %s6, %s4
  $region1: #{tpu_custom_call.1} parent=0
    #allocation3 [shape = 'u8[24576]{0}', space=vmem, size = 0x6000, scoped, tag = 'output window, operand 0, single buffered']
    #allocation4 [shape = 's32[1]{0}', space=sflag, size = 0x4, scoped, tag = 'scoped memory for tpu_custom_call.1']
    %8 = vsyncpa [#allocation4], 0
    // Predicated region
    $region2: #{tpu_custom_call.1} parent=1 // pred_check
      _
    $region3: #{tpu_custom_call.1} parent=1 // pred_check_branch
      %10 = sbr.rel (0) target = $region5
    $region4: #{tpu_custom_call.1} parent=1 // pred_region
      _
    $region5: #{tpu_custom_call.1} parent=1 // pred_fallthru
      _
    // Predicated region
    $region6: #{tpu_custom_call.1} parent=1 // pred_check
      _
    $region7: #{tpu_custom_call.1} parent=1 // pred_check_branch
      %12 = sbr.rel (0) target = $region9
    $region8: #{tpu_custom_call.1} parent=1 // pred_region
      _
    $region9: #{tpu_custom_call.1} parent=1 // pred_fallthru
      _
    // Predicated region
    $region10: #{tpu_custom_call.1} parent=1 // pred_check
      _
    $region11: #{tpu_custom_call.1} parent=1 // pred_check_branch
      %14 = sbr.rel (0) target = $region13
    $region12: #{tpu_custom_call.1} parent=1 // pred_region
      _
    $region13: #{tpu_custom_call.1} parent=1 // pred_fallthru
      _
    %p16 = scmp.eq.s32.totalorder 0, 0
    // Predicated region
    $region14: #{tpu_custom_call.1} parent=1 // pred_check
      %p17 = pneg %p16
    $region15: #{tpu_custom_call.1} parent=1 // pred_check_branch
      %19 = sbr.rel (%p17) target = $region17
    $region16: #{tpu_custom_call.1} parent=1 // pred_region
      %vm20 = vcmask 785408
      %21 = vst.msk [vmem:[#allocation2] sm:$0xff] %vm20, 0.0
      %22 = vst.msk [vmem:[#allocation2 + $0x8] sm:$0xff] %vm20, 0.0
      %23 = vst.msk [vmem:[#allocation2 + $0x10] sm:$0xff] %vm20, 0.0
      %24 = vst.msk [vmem:[#allocation2 + $0x18] sm:$0xff] %vm20, 0.0
      %25 = vst.msk [vmem:[#allocation2 + $0x20] sm:$0xff] %vm20, 0.0
      %26 = vst.msk [vmem:[#allocation2 + $0x28] sm:$0xff] %vm20, 0.0
    $region17: #{tpu_custom_call.1} parent=1 // pred_fallthru
      _
    %v27 = vld [vmem:[#allocation2] sm:$0xff]
    %v28 = vld [vmem:[#allocation2 + $0x8] sm:$0xff]
    %v29 = vld [vmem:[#allocation2 + $0x10] sm:$0xff]
    %v30 = vld [vmem:[#allocation2 + $0x18] sm:$0xff]
    %v31 = vld [vmem:[#allocation2 + $0x20] sm:$0xff]
    %v32 = vld [vmem:[#allocation2 + $0x28] sm:$0xff]
    %v33 = vld [vmem:[%s0] sm:$0xff]
    %v34 = vld [vmem:[%s0 + $0x8] sm:$0xff]
    %v35 = vld [vmem:[%s0 + $0x10] sm:$0xff]
    %v36 = vld [vmem:[%s0 + $0x18] sm:$0xff]
    %v37 = vld [vmem:[%s0 + $0x20] sm:$0xff]
    %v38 = vld [vmem:[%s0 + $0x28] sm:$0xff]
    %v39 = vpack.c.bf16 %v34, %v33
    %v40 = vpack.c.bf16 %v36, %v35
    %v41 = vpack.c.bf16 %v38, %v37
    %v42 = vld [vmem:[%s1] sm:$0xff]
    %v43 = vld [vmem:[%s1 + $0x8] sm:$0xff]
    %v44 = vld [vmem:[%s1 + $0x10] sm:$0xff]
    %v45 = vld [vmem:[%s1 + $0x18] sm:$0xff]
    %v46 = vpack.c.bf16 %v43, %v42
    %v47 = vpack.c.bf16 %v45, %v44
    %vm48 = vcmask 261120
    %v50 = vsel %vm48, %v39, 0
    %v53 = vsel %vm48, %v40, 0
    %v56 = vsel %vm48, %v41, 0
    %58 = vmatpush.bf16.msra.mxu0 0
    %59 = vmatpush.bf16.msra.mxu0 0
    %60 = vmatpush.bf16.msra.mxu0 0
    %61 = vmatpush.bf16.msra.mxu0 0
    %62 = vmatpush.bf16.msra.mxu0 0
    %63 = vmatpush.bf16.msra.mxu0 0
    %64 = vmatpush.bf16.msra.mxu0 %v47
    %65 = vmatpush.bf16.msra.mxu0 %v46
    %66 = vmatmul.bf16.gmra.mxu0 %v50
    %v67 = vpop.f32.mrf.mxu0
    %v68 = vadd.f32 0.0, %v67
    %v69 = vpop.f32.mrf.mxu0
    %v70 = vadd.f32 0.0, %v69
    %71 = vmatmul.bf16.gmra.mxu0 %v53
    %v72 = vpop.f32.mrf.mxu0
    %v73 = vadd.f32 0.0, %v72
    %v74 = vpop.f32.mrf.mxu0
    %v75 = vadd.f32 0.0, %v74
    %76 = vmatmul.bf16.gmra.mxu0 %v56
    %v77 = vpop.f32.mrf.mxu0
    %v78 = vadd.f32 0.0, %v77
    %v79 = vpop.f32.mrf.mxu0
    %v80 = vadd.f32 0.0, %v79
    %81 = vdwg.mxu0
    %v82 = vadd.f32 %v27, %v68
    %v83 = vadd.f32 %v28, %v70
    %v84 = vadd.f32 %v29, %v73
    %v85 = vadd.f32 %v30, %v75
    %v86 = vadd.f32 %v31, %v78
    %v87 = vadd.f32 %v32, %v80
    %vm88 = vcmask 785408
    %89 = vst.msk [vmem:[#allocation2] sm:$0xff] %vm88, %v82
    %90 = vst.msk [vmem:[#allocation2 + $0x8] sm:$0xff] %vm88, %v83
    %91 = vst.msk [vmem:[#allocation2 + $0x10] sm:$0xff] %vm88, %v84
    %92 = vst.msk [vmem:[#allocation2 + $0x18] sm:$0xff] %vm88, %v85
    %93 = vst.msk [vmem:[#allocation2 + $0x20] sm:$0xff] %vm88, %v86
    %94 = vst.msk [vmem:[#allocation2 + $0x28] sm:$0xff] %vm88, %v87
    // Predicated region
    $region18: #{tpu_custom_call.1} parent=1 // pred_check
      %p95 = pneg %p16
    $region19: #{tpu_custom_call.1} parent=1 // pred_check_branch
      %97 = sbr.rel (%p95) target = $region21
    $region20: #{tpu_custom_call.1} parent=1 // pred_region
      %v98 = vld [vmem:[#allocation2] sm:$0xff]
      %v99 = vld [vmem:[#allocation2 + $0x8] sm:$0xff]
      %v100 = vld [vmem:[#allocation2 + $0x10] sm:$0xff]
      %v101 = vld [vmem:[#allocation2 + $0x18] sm:$0xff]
      %v102 = vld [vmem:[#allocation2 + $0x20] sm:$0xff]
      %v103 = vld [vmem:[#allocation2 + $0x28] sm:$0xff]
      %v104 = vld [vmem:[%s2] sm:$0x1]
      %v106 = vperm.slane %v104, 0
      %v108 = vadd.f32 %v98, %v106
      %v109 = vadd.f32 %v99, %v106
      %v110 = vadd.f32 %v100, %v106
      %v111 = vadd.f32 %v101, %v106
      %v112 = vadd.f32 %v102, %v106
      %v113 = vadd.f32 %v103, %v106
      %114 = vst.msk [vmem:[#allocation3] sm:$0xff] %vm88, %v108
      %115 = vst.msk [vmem:[#allocation3 + $0x8] sm:$0xff] %vm88, %v109
      %116 = vst.msk [vmem:[#allocation3 + $0x10] sm:$0xff] %vm88, %v110
      %117 = vst.msk [vmem:[#allocation3 + $0x18] sm:$0xff] %vm88, %v111
      %118 = vst.msk [vmem:[#allocation3 + $0x20] sm:$0xff] %vm88, %v112
      %119 = vst.msk [vmem:[#allocation3 + $0x28] sm:$0xff] %vm88, %v113
    $region21: #{tpu_custom_call.1} parent=1 // pred_fallthru
      _
    // Predicated region
    $region22: #{tpu_custom_call.1} parent=1 // pred_check
      _
    $region23: #{tpu_custom_call.1} parent=1 // pred_check_branch
      %121 = sbr.rel (0) target = $region25
    $region24: #{tpu_custom_call.1} parent=1 // pred_region
      %123 = vsyncadd [#allocation4], 0
      %s124 = sshll.u32 [#allocation3], 4
      %s125 = int_to_ptr.vmem [resolvable:$true] %s124
      %s126 = sshll.u32 %s3, 4
      %s127 = int_to_ptr.hbm [resolvable:$true] %s126
      %132 = dma.vmem_to_hbm [thread:$0]  %s125, 768, %s127, [#allocation4], 128, 128, 8
    $region25: #{tpu_custom_call.1} parent=1 // pred_fallthru
      _
    // Predicated region
    $region26: #{tpu_custom_call.1} parent=1 // pred_check
      _
    $region27: #{tpu_custom_call.1} parent=1 // pred_check_branch
      %134 = sbr.rel (0) target = $region29
    $region28: #{tpu_custom_call.1} parent=1 // pred_region
      %136 = dma.done [#allocation4], 768
    $region29: #{tpu_custom_call.1} parent=1 // pred_fallthru
      _
    %137 = vsyncpa [#allocation4], 1

</llo_original>
